<compile_context>
chip_gen: v7x
topology: tpu7x:2x2x1
jax: 0.10.0
libtpu: 0.0.40
codegen_flags: <defaults>
</compile_context>

<pallas_src>
import jax
import jax.numpy as jnp
from jax.experimental import pallas as pl
from jax.experimental.pallas import tpu as pltpu


def downsampler_kernel(xt_ref, w1_ref, b1_ref, w2_ref, b2_ref, w3_ref, b3_ref, o_ref):
    # xt_ref: (4, th+1, Wo+1, Cin) parity-split, zero-padded, row-tiled input (+1-row halo)
    #         plane p = 2a+b holds xp[2i+a, 2j+b, :] for the rows of this tile.
    # w1_ref: (4, 4, C)   per-output-channel taps of grouped conv k=4 (permuted order)
    # w2_ref: (2, 2, C)   per-output-channel taps of grouped conv k=2 (permuted order)
    # w3_ref: (2C, C)     1x1 conv weight, bf16, rows permuted to match
    # b*_ref: biases; o_ref: (th, Wo, C) output row tile
    th, Wo, C = o_ref.shape
    Cin = xt_ref.shape[-1]
    m = C // Cin
    f32 = jnp.float32

    w1 = w1_ref[...]
    w2 = w2_ref[...]

    # Accumulators live as values (vregs / compiler-managed VMEM); bias broadcast hoisted.
    acc1 = jnp.broadcast_to(b1_ref[...], (th, Wo, C)).astype(f32)
    acc2 = jnp.broadcast_to(b2_ref[...], (th, Wo, C)).astype(f32)

    # Process one (row-parity a, col-parity b) plane at a time to keep the live working
    # set small.  All tap slices below are aligned: the row (+di) offset is on the major
    # axis (free) and the column (+dj) shift was hoisted to one slice per plane.
    for a in range(2):
        for b in range(2):
            p = xt_ref[2 * a + b]                          # (th+1, Wo+1, Cin)
            # grouped-conv channel expansion: position o' = r*Cin + cin holds channel cin
            pe = jnp.concatenate([p] * m, axis=-1)         # (th+1, Wo+1, C)
            # hoisted column shifts (dj = 0, 1); one sublane-offset slice per plane.
            # (further micro-opt: pltpu.roll(pe, -1, axis=1) would do this on the XLU)
            sl = (pe[:, 0:Wo, :], pe[:, 1:Wo + 1, :])
            # conv #1 (k=4, s=2, p=1): taps (kh, kw) = (a + 2*di, b + 2*dj)
            for di in range(2):
                for dj in range(2):
                    patch = sl[dj][di:di + th]             # (th, Wo, C)
                    acc1 = acc1 + patch * w1[a + 2 * di:a + 2 * di + 1,
                                             b + 2 * dj:b + 2 * dj + 1, :]
            # conv #2 (k=2, s=2, no pad): tap (kh, kw) = (1-a, 1-b) lands on this parity
            # with shifts (di, dj) = (1-a, 1-b)
            patch = sl[1 - b][1 - a:1 - a + th]
            acc2 = acc2 + patch * w2[1 - a:2 - a, 1 - b:2 - b, :]

    # 1x1 conv over concat([acc1, acc2], channel) as ONE bf16 MXU matmul (K = 2C),
    # accumulation in f32, then ELU.
    cat = jnp.concatenate([acc1, acc2], axis=-1)           # (th, Wo, 2C)
    cat = cat.reshape(th * Wo, 2 * C).astype(jnp.bfloat16)
    y = jnp.dot(cat, w3_ref[...], preferred_element_type=f32)
    y = y + b3_ref[...]
    y = jnp.where(y > 0, y, jnp.exp(jnp.minimum(y, 0.0)) - 1.0)  # ELU, alpha=1.0
    o_ref[...] = y.reshape(th, Wo, C).astype(o_ref.dtype)


def _pick_row_tile(Ho, Wo, Cin, Cout, budget_bytes=6 << 20):
    """Largest row tile (divisor of Ho) whose double-buffered working set fits the VMEM
    budget, while keeping >= 2 row tiles when possible (pipeline depth / 2-TC sharding)."""
    def tile_bytes(th):
        in_b = 4 * (th + 1) * (Wo + 1) * Cin * 4           # parity-split input tile
        out_b = th * Wo * Cout * 4                          # output tile
        planes_b = 2 * (th + 1) * (Wo + 1) * Cout * 4       # expanded plane + shifted view
        acc_b = 6 * th * Wo * Cout * 4                      # acc1, acc2, cat(2C), y, slack
        return 2 * (in_b + out_b) + planes_b + acc_b        # x2: double-buffered I/O
    divisors = [d for d in range(1, Ho + 1) if Ho % d == 0]
    fit = [d for d in divisors if tile_bytes(d) <= budget_bytes]
    if not fit:
        return 1
    th = max(fit)
    if th == Ho and len(fit) > 1:
        th = sorted(fit)[-2]
    return th


def downsampler_forward(x_nchw, params):
    """x_nchw: (B, Cin, H, W) float32. Returns (B, Cout, H//2, W//2)."""
    w1, b1, w2, b2, w3, b3 = params
    B, Cin, H, W = x_nchw.shape
    Cout = w1.shape[0]
    assert H % 2 == 0 and W % 2 == 0, "spatial dims must be even"
    assert Cout % Cin == 0, "dim_out must be a multiple of dim_in (groups=dim_in)"
    m = Cout // Cin
    Ho, Wo = H // 2, W // 2
    Hp2, Wp2 = Ho + 1, Wo + 1

    th = _pick_row_tile(Ho, Wo, Cin, Cout)
    nT = Ho // th

    # ---- layout-only glue (plain JAX) ----
    x = jnp.transpose(x_nchw, (0, 2, 3, 1))                 # NHWC (Cin wide: no HBM repeat)
    xp = jnp.pad(x, ((0, 0), (1, 1), (1, 1), (0, 0)))       # spatial pad = 1
    # parity space-to-depth: xpar[n, 2a+b, i, j, c] = xp[n, 2i+a, 2j+b, c]
    xpar = xp.reshape(B, Hp2, 2, Wp2, 2, Cin).transpose(0, 2, 4, 1, 3, 5)
    xpar = xpar.reshape(B, 4, Hp2, Wp2, Cin)
    # row tiles with a 1-row halo: output rows [t*th, (t+1)*th) need parity rows
    # [t*th, t*th + th + 1)
    xt = jnp.stack([xpar[:, :, t * th:t * th + th + 1] for t in range(nT)], axis=1)
    # -> (B, nT, 4, th+1, Wp2, Cin)

    # ---- weight prep: permuted output-channel order o' = r*Cin + cin ----
    perm = jnp.array([(o % Cin) * m + o // Cin for o in range(Cout)], dtype=jnp.int32)
    w1k = jnp.transpose(w1[perm, 0, :, :], (1, 2, 0))       # (4, 4, Cout)
    w2k = jnp.transpose(w2[perm, 0, :, :], (1, 2, 0))       # (2, 2, Cout)
    b1k = b1[perm].reshape(1, 1, Cout)
    b2k = b2[perm].reshape(1, 1, Cout)
    row_perm = jnp.concatenate([perm, perm + Cout])
    w3k = jnp.transpose(w3[:, :, 0, 0], (1, 0))[row_perm].astype(jnp.bfloat16)  # (2C, C)
    b3k = b3.reshape(1, Cout).astype(jnp.float32)

    # explicit VMEM limit derived from the chosen tiles (safe on v5e/v6e/v7x)
    per_step = 4 * (th + 1) * Wp2 * Cin * 4 + th * Wo * Cout * 4
    vmem_limit = int(min(max(6 * per_step + (4 << 20), 8 << 20), 32 << 20))

    out_nhwc = pl.pallas_call(
        downsampler_kernel,
        out_shape=jax.ShapeDtypeStruct((B, Ho, Wo, Cout), x_nchw.dtype),
        grid=(B, nT),
        in_specs=[
            pl.BlockSpec((None, None, 4, th + 1, Wp2, Cin),
                         lambda n, t: (n, t, 0, 0, 0, 0)),
            pl.BlockSpec((4, 4, Cout), lambda n, t: (0, 0, 0)),
            pl.BlockSpec((1, 1, Cout), lambda n, t: (0, 0, 0)),
            pl.BlockSpec((2, 2, Cout), lambda n, t: (0, 0, 0)),
            pl.BlockSpec((1, 1, Cout), lambda n, t: (0, 0, 0)),
            pl.BlockSpec((2 * Cout, Cout), lambda n, t: (0, 0)),
            pl.BlockSpec((1, Cout), lambda n, t: (0, 0)),
        ],
        out_specs=pl.BlockSpec((None, th, Wo, Cout), lambda n, t: (n, t, 0, 0)),
        compiler_params=pltpu.CompilerParams(
            dimension_semantics=("parallel", "parallel"),
            vmem_limit_bytes=vmem_limit),
    )(xt, w1k, b1k, w2k, b2k, w3k, b3k)

    return jnp.transpose(out_nhwc, (0, 3, 1, 2))            # back to NCHW


def reference_forward(x, params):
    """Pure-JAX reference reproducing the PyTorch forward (NCHW, f32)."""
    w1, b1, w2, b2, w3, b3 = params
    Cin = x.shape[1]
    dn = ("NCHW", "OIHW", "NCHW")
    x1 = jax.lax.conv_general_dilated(x, w1, (2, 2), ((1, 1), (1, 1)),
                                      dimension_numbers=dn, feature_group_count=Cin)
    x1 = x1 + b1[None, :, None, None]
    x2 = jax.lax.conv_general_dilated(x, w2, (2, 2), "VALID",
                                      dimension_numbers=dn, feature_group_count=Cin)
    x2 = x2 + b2[None, :, None, None]
    xc = jnp.concatenate([x1, x2], axis=1)
    y = jax.lax.conv_general_dilated(xc, w3, (1, 1), "VALID", dimension_numbers=dn)
    y = y + b3[None, :, None, None]
    return jax.nn.elu(y)


def init_params(key, dim_in, dim_out):
    ks = jax.random.split(key, 6)
    w1 = jax.random.normal(ks[0], (dim_out, 1, 4, 4), jnp.float32) * 0.1   # groups=dim_in
    b1 = jax.random.normal(ks[1], (dim_out,), jnp.float32) * 0.1
    w2 = jax.random.normal(ks[2], (dim_out, 1, 2, 2), jnp.float32) * 0.1   # groups=dim_in
    b2 = jax.random.normal(ks[3], (dim_out,), jnp.float32) * 0.1
    w3 = jax.random.normal(ks[4], (dim_out, 2 * dim_out, 1, 1), jnp.float32) * 0.1
    b3 = jax.random.normal(ks[5], (dim_out,), jnp.float32) * 0.1
    return (w1, b1, w2, b2, w3, b3)


if __name__ == "__main__":
    key = jax.random.PRNGKey(0)
    k_x, k_p = jax.random.split(key)

    B, dim_in, H, W = 2, 4, 16, 16
    dim_out = 8  # must be a multiple of dim_in (groups=dim_in)

    x = jax.random.normal(k_x, (B, dim_in, H, W), jnp.float32)
    params = init_params(k_p, dim_in, dim_out)

    out = jax.block_until_ready(downsampler_forward(x, params))
    ref = jax.block_until_ready(reference_forward(x, params))

    assert out.shape == (B, dim_out, H // 2, W // 2), out.shape
    max_err = float(jnp.max(jnp.abs(out - ref)))
    # tolerance loosened vs f32 because the 1x1 conv runs as a bf16 MXU matmul (f32 accum)
    assert jnp.allclose(out, ref, atol=2e-2, rtol=2e-2), max_err

    print("KERNEL_OK")
</pallas_src>

<mosaic_0001>
module attributes {stable_mosaic.version = 11 : i64} {
  func.func @downsampler_kernel(%arg0: i32, %arg1: i32, %arg2: memref<1x1x4x5x9x4xf32, #tpu.memory_space<vmem>>, %arg3: memref<4x4x8xf32, #tpu.memory_space<vmem>>, %arg4: memref<1x1x8xf32, #tpu.memory_space<vmem>>, %arg5: memref<2x2x8xf32, #tpu.memory_space<vmem>>, %arg6: memref<1x1x8xf32, #tpu.memory_space<vmem>>, %arg7: memref<16x8xbf16, #tpu.memory_space<vmem>>, %arg8: memref<1x8xf32, #tpu.memory_space<vmem>>, %arg9: memref<1x4x8x8xf32, #tpu.memory_space<vmem>>) attributes {dimension_semantics = [#tpu.dimension_semantics<parallel>, #tpu.dimension_semantics<parallel>], iteration_bounds = array<i64: 2, 2>, scalar_prefetch = 0 : i64, scratch_operands = 0 : i64, tpu.core_type = #tpu.core_type<tc>, window_params = [{transform_indices = @transform_0, window_bounds = array<i64: 1, 1, 4, 5, 9, 4>}, {pipeline_mode = #tpu.pipeline_mode<synchronous>, transform_indices = @transform_1, window_bounds = array<i64: 4, 4, 8>}, {pipeline_mode = #tpu.pipeline_mode<synchronous>, transform_indices = @transform_2, window_bounds = array<i64: 1, 1, 8>}, {pipeline_mode = #tpu.pipeline_mode<synchronous>, transform_indices = @transform_3, window_bounds = array<i64: 2, 2, 8>}, {pipeline_mode = #tpu.pipeline_mode<synchronous>, transform_indices = @transform_4, window_bounds = array<i64: 1, 1, 8>}, {pipeline_mode = #tpu.pipeline_mode<synchronous>, transform_indices = @transform_5, window_bounds = array<i64: 16, 8>}, {pipeline_mode = #tpu.pipeline_mode<synchronous>, transform_indices = @transform_6, window_bounds = array<i64: 1, 8>}, {transform_indices = @transform_7, window_bounds = array<i64: 1, 4, 8, 8>}]} {
    %c0 = arith.constant 0 : index
    %c0_0 = arith.constant 0 : index
    %c0_1 = arith.constant 0 : index
    %0 = vector.load %arg3[%c0, %c0_0, %c0_1] : memref<4x4x8xf32, #tpu.memory_space<vmem>>, vector<4x4x8xf32>
    %c0_2 = arith.constant 0 : index
    %c0_3 = arith.constant 0 : index
    %c0_4 = arith.constant 0 : index
    %1 = vector.load %arg5[%c0_2, %c0_3, %c0_4] : memref<2x2x8xf32, #tpu.memory_space<vmem>>, vector<2x2x8xf32>
    %c0_5 = arith.constant 0 : index
    %c0_6 = arith.constant 0 : index
    %c0_7 = arith.constant 0 : index
    %2 = vector.load %arg4[%c0_5, %c0_6, %c0_7] : memref<1x1x8xf32, #tpu.memory_space<vmem>>, vector<1x1x8xf32>
    %3 = vector.shape_cast %2 : vector<1x1x8xf32> to vector<1x1x8xf32>
    %4 = vector.broadcast %3 : vector<1x1x8xf32> to vector<4x8x8xf32>
    %c0_8 = arith.constant 0 : index
    %c0_9 = arith.constant 0 : index
    %c0_10 = arith.constant 0 : index
    %5 = vector.load %arg6[%c0_8, %c0_9, %c0_10] : memref<1x1x8xf32, #tpu.memory_space<vmem>>, vector<1x1x8xf32>
    %6 = vector.shape_cast %5 : vector<1x1x8xf32> to vector<1x1x8xf32>
    %7 = vector.broadcast %6 : vector<1x1x8xf32> to vector<4x8x8xf32>
    %c0_11 = arith.constant 0 : index
    %c0_12 = arith.constant 0 : index
    %c0_13 = arith.constant 0 : index
    %c0_14 = arith.constant 0 : index
    %c0_15 = arith.constant 0 : index
    %c0_16 = arith.constant 0 : index
    %8 = vector.load %arg2[%c0_11, %c0_12, %c0_13, %c0_14, %c0_15, %c0_16] : memref<1x1x4x5x9x4xf32, #tpu.memory_space<vmem>>, vector<1x1x1x5x9x4xf32>
    %9 = vector.shape_cast %8 : vector<1x1x1x5x9x4xf32> to vector<5x9x4xf32>
    %10 = tpu.concatenate %9, %9 in 2 : vector<5x9x4xf32>, vector<5x9x4xf32> -> vector<5x9x8xf32>
    %11 = vector.extract_strided_slice %10 {offsets = [0, 0, 0], sizes = [5, 8, 8], strides = [1, 1, 1]} : vector<5x9x8xf32> to vector<5x8x8xf32>
    %12 = vector.extract_strided_slice %10 {offsets = [0, 1, 0], sizes = [5, 8, 8], strides = [1, 1, 1]} : vector<5x9x8xf32> to vector<5x8x8xf32>
    %13 = vector.extract_strided_slice %11 {offsets = [0, 0, 0], sizes = [4, 8, 8], strides = [1, 1, 1]} : vector<5x8x8xf32> to vector<4x8x8xf32>
    %14 = vector.extract_strided_slice %0 {offsets = [0, 0, 0], sizes = [1, 1, 8], strides = [1, 1, 1]} : vector<4x4x8xf32> to vector<1x1x8xf32>
    %15 = vector.broadcast %14 : vector<1x1x8xf32> to vector<4x8x8xf32>
    %16 = arith.mulf %13, %15 : vector<4x8x8xf32>
    %17 = arith.addf %4, %16 : vector<4x8x8xf32>
    %18 = vector.extract_strided_slice %12 {offsets = [0, 0, 0], sizes = [4, 8, 8], strides = [1, 1, 1]} : vector<5x8x8xf32> to vector<4x8x8xf32>
    %19 = vector.extract_strided_slice %0 {offsets = [0, 2, 0], sizes = [1, 1, 8], strides = [1, 1, 1]} : vector<4x4x8xf32> to vector<1x1x8xf32>
    %20 = vector.broadcast %19 : vector<1x1x8xf32> to vector<4x8x8xf32>
    %21 = arith.mulf %18, %20 : vector<4x8x8xf32>
    %22 = arith.addf %17, %21 : vector<4x8x8xf32>
    %23 = vector.extract_strided_slice %11 {offsets = [1, 0, 0], sizes = [4, 8, 8], strides = [1, 1, 1]} : vector<5x8x8xf32> to vector<4x8x8xf32>
    %24 = vector.extract_strided_slice %0 {offsets = [2, 0, 0], sizes = [1, 1, 8], strides = [1, 1, 1]} : vector<4x4x8xf32> to vector<1x1x8xf32>
    %25 = vector.broadcast %24 : vector<1x1x8xf32> to vector<4x8x8xf32>
    %26 = arith.mulf %23, %25 : vector<4x8x8xf32>
    %27 = arith.addf %22, %26 : vector<4x8x8xf32>
    %28 = vector.extract_strided_slice %12 {offsets = [1, 0, 0], sizes = [4, 8, 8], strides = [1, 1, 1]} : vector<5x8x8xf32> to vector<4x8x8xf32>
    %29 = vector.extract_strided_slice %0 {offsets = [2, 2, 0], sizes = [1, 1, 8], strides = [1, 1, 1]} : vector<4x4x8xf32> to vector<1x1x8xf32>
    %30 = vector.broadcast %29 : vector<1x1x8xf32> to vector<4x8x8xf32>
    %31 = arith.mulf %28, %30 : vector<4x8x8xf32>
    %32 = arith.addf %27, %31 : vector<4x8x8xf32>
    %33 = vector.extract_strided_slice %12 {offsets = [1, 0, 0], sizes = [4, 8, 8], strides = [1, 1, 1]} : vector<5x8x8xf32> to vector<4x8x8xf32>
    %34 = vector.extract_strided_slice %1 {offsets = [1, 1, 0], sizes = [1, 1, 8], strides = [1, 1, 1]} : vector<2x2x8xf32> to vector<1x1x8xf32>
    %35 = vector.broadcast %34 : vector<1x1x8xf32> to vector<4x8x8xf32>
    %36 = arith.mulf %33, %35 : vector<4x8x8xf32>
    %37 = arith.addf %7, %36 : vector<4x8x8xf32>
    %c0_17 = arith.constant 0 : index
    %c0_18 = arith.constant 0 : index
    %c1 = arith.constant 1 : index
    %c0_19 = arith.constant 0 : index
    %c0_20 = arith.constant 0 : index
    %c0_21 = arith.constant 0 : index
    %38 = vector.load %arg2[%c0_17, %c0_18, %c1, %c0_19, %c0_20, %c0_21] : memref<1x1x4x5x9x4xf32, #tpu.memory_space<vmem>>, vector<1x1x1x5x9x4xf32>
    %39 = vector.shape_cast %38 : vector<1x1x1x5x9x4xf32> to vector<5x9x4xf32>
    %40 = tpu.concatenate %39, %39 in 2 : vector<5x9x4xf32>, vector<5x9x4xf32> -> vector<5x9x8xf32>
    %41 = vector.extract_strided_slice %40 {offsets = [0, 0, 0], sizes = [5, 8, 8], strides = [1, 1, 1]} : vector<5x9x8xf32> to vector<5x8x8xf32>
    %42 = vector.extract_strided_slice %40 {offsets = [0, 1, 0], sizes = [5, 8, 8], strides = [1, 1, 1]} : vector<5x9x8xf32> to vector<5x8x8xf32>
    %43 = vector.extract_strided_slice %41 {offsets = [0, 0, 0], sizes = [4, 8, 8], strides = [1, 1, 1]} : vector<5x8x8xf32> to vector<4x8x8xf32>
    %44 = vector.extract_strided_slice %0 {offsets = [0, 1, 0], sizes = [1, 1, 8], strides = [1, 1, 1]} : vector<4x4x8xf32> to vector<1x1x8xf32>
    %45 = vector.broadcast %44 : vector<1x1x8xf32> to vector<4x8x8xf32>
    %46 = arith.mulf %43, %45 : vector<4x8x8xf32>
    %47 = arith.addf %32, %46 : vector<4x8x8xf32>
    %48 = vector.extract_strided_slice %42 {offsets = [0, 0, 0], sizes = [4, 8, 8], strides = [1, 1, 1]} : vector<5x8x8xf32> to vector<4x8x8xf32>
    %49 = vector.extract_strided_slice %0 {offsets = [0, 3, 0], sizes = [1, 1, 8], strides = [1, 1, 1]} : vector<4x4x8xf32> to vector<1x1x8xf32>
    %50 = vector.broadcast %49 : vector<1x1x8xf32> to vector<4x8x8xf32>
    %51 = arith.mulf %48, %50 : vector<4x8x8xf32>
    %52 = arith.addf %47, %51 : vector<4x8x8xf32>
    %53 = vector.extract_strided_slice %41 {offsets = [1, 0, 0], sizes = [4, 8, 8], strides = [1, 1, 1]} : vector<5x8x8xf32> to vector<4x8x8xf32>
    %54 = vector.extract_strided_slice %0 {offsets = [2, 1, 0], sizes = [1, 1, 8], strides = [1, 1, 1]} : vector<4x4x8xf32> to vector<1x1x8xf32>
    %55 = vector.broadcast %54 : vector<1x1x8xf32> to vector<4x8x8xf32>
    %56 = arith.mulf %53, %55 : vector<4x8x8xf32>
    %57 = arith.addf %52, %56 : vector<4x8x8xf32>
    %58 = vector.extract_strided_slice %42 {offsets = [1, 0, 0], sizes = [4, 8, 8], strides = [1, 1, 1]} : vector<5x8x8xf32> to vector<4x8x8xf32>
    %59 = vector.extract_strided_slice %0 {offsets = [2, 3, 0], sizes = [1, 1, 8], strides = [1, 1, 1]} : vector<4x4x8xf32> to vector<1x1x8xf32>
    %60 = vector.broadcast %59 : vector<1x1x8xf32> to vector<4x8x8xf32>
    %61 = arith.mulf %58, %60 : vector<4x8x8xf32>
    %62 = arith.addf %57, %61 : vector<4x8x8xf32>
    %63 = vector.extract_strided_slice %41 {offsets = [1, 0, 0], sizes = [4, 8, 8], strides = [1, 1, 1]} : vector<5x8x8xf32> to vector<4x8x8xf32>
    %64 = vector.extract_strided_slice %1 {offsets = [1, 0, 0], sizes = [1, 1, 8], strides = [1, 1, 1]} : vector<2x2x8xf32> to vector<1x1x8xf32>
    %65 = vector.broadcast %64 : vector<1x1x8xf32> to vector<4x8x8xf32>
    %66 = arith.mulf %63, %65 : vector<4x8x8xf32>
    %67 = arith.addf %37, %66 : vector<4x8x8xf32>
    %c0_22 = arith.constant 0 : index
    %c0_23 = arith.constant 0 : index
    %c2 = arith.constant 2 : index
    %c0_24 = arith.constant 0 : index
    %c0_25 = arith.constant 0 : index
    %c0_26 = arith.constant 0 : index
    %68 = vector.load %arg2[%c0_22, %c0_23, %c2, %c0_24, %c0_25, %c0_26] : memref<1x1x4x5x9x4xf32, #tpu.memory_space<vmem>>, vector<1x1x1x5x9x4xf32>
    %69 = vector.shape_cast %68 : vector<1x1x1x5x9x4xf32> to vector<5x9x4xf32>
    %70 = tpu.concatenate %69, %69 in 2 : vector<5x9x4xf32>, vector<5x9x4xf32> -> vector<5x9x8xf32>
    %71 = vector.extract_strided_slice %70 {offsets = [0, 0, 0], sizes = [5, 8, 8], strides = [1, 1, 1]} : vector<5x9x8xf32> to vector<5x8x8xf32>
    %72 = vector.extract_strided_slice %70 {offsets = [0, 1, 0], sizes = [5, 8, 8], strides = [1, 1, 1]} : vector<5x9x8xf32> to vector<5x8x8xf32>
    %73 = vector.extract_strided_slice %71 {offsets = [0, 0, 0], sizes = [4, 8, 8], strides = [1, 1, 1]} : vector<5x8x8xf32> to vector<4x8x8xf32>
    %74 = vector.extract_strided_slice %0 {offsets = [1, 0, 0], sizes = [1, 1, 8], strides = [1, 1, 1]} : vector<4x4x8xf32> to vector<1x1x8xf32>
    %75 = vector.broadcast %74 : vector<1x1x8xf32> to vector<4x8x8xf32>
    %76 = arith.mulf %73, %75 : vector<4x8x8xf32>
    %77 = arith.addf %62, %76 : vector<4x8x8xf32>
    %78 = vector.extract_strided_slice %72 {offsets = [0, 0, 0], sizes = [4, 8, 8], strides = [1, 1, 1]} : vector<5x8x8xf32> to vector<4x8x8xf32>
    %79 = vector.extract_strided_slice %0 {offsets = [1, 2, 0], sizes = [1, 1, 8], strides = [1, 1, 1]} : vector<4x4x8xf32> to vector<1x1x8xf32>
    %80 = vector.broadcast %79 : vector<1x1x8xf32> to vector<4x8x8xf32>
    %81 = arith.mulf %78, %80 : vector<4x8x8xf32>
    %82 = arith.addf %77, %81 : vector<4x8x8xf32>
    %83 = vector.extract_strided_slice %71 {offsets = [1, 0, 0], sizes = [4, 8, 8], strides = [1, 1, 1]} : vector<5x8x8xf32> to vector<4x8x8xf32>
    %84 = vector.extract_strided_slice %0 {offsets = [3, 0, 0], sizes = [1, 1, 8], strides = [1, 1, 1]} : vector<4x4x8xf32> to vector<1x1x8xf32>
    %85 = vector.broadcast %84 : vector<1x1x8xf32> to vector<4x8x8xf32>
    %86 = arith.mulf %83, %85 : vector<4x8x8xf32>
    %87 = arith.addf %82, %86 : vector<4x8x8xf32>
    %88 = vector.extract_strided_slice %72 {offsets = [1, 0, 0], sizes = [4, 8, 8], strides = [1, 1, 1]} : vector<5x8x8xf32> to vector<4x8x8xf32>
    %89 = vector.extract_strided_slice %0 {offsets = [3, 2, 0], sizes = [1, 1, 8], strides = [1, 1, 1]} : vector<4x4x8xf32> to vector<1x1x8xf32>
    %90 = vector.broadcast %89 : vector<1x1x8xf32> to vector<4x8x8xf32>
    %91 = arith.mulf %88, %90 : vector<4x8x8xf32>
    %92 = arith.addf %87, %91 : vector<4x8x8xf32>
    %93 = vector.extract_strided_slice %72 {offsets = [0, 0, 0], sizes = [4, 8, 8], strides = [1, 1, 1]} : vector<5x8x8xf32> to vector<4x8x8xf32>
    %94 = vector.extract_strided_slice %1 {offsets = [0, 1, 0], sizes = [1, 1, 8], strides = [1, 1, 1]} : vector<2x2x8xf32> to vector<1x1x8xf32>
    %95 = vector.broadcast %94 : vector<1x1x8xf32> to vector<4x8x8xf32>
    %96 = arith.mulf %93, %95 : vector<4x8x8xf32>
    %97 = arith.addf %67, %96 : vector<4x8x8xf32>
    %c0_27 = arith.constant 0 : index
    %c0_28 = arith.constant 0 : index
    %c3 = arith.constant 3 : index
    %c0_29 = arith.constant 0 : index
    %c0_30 = arith.constant 0 : index
    %c0_31 = arith.constant 0 : index
    %98 = vector.load %arg2[%c0_27, %c0_28, %c3, %c0_29, %c0_30, %c0_31] : memref<1x1x4x5x9x4xf32, #tpu.memory_space<vmem>>, vector<1x1x1x5x9x4xf32>
    %99 = vector.shape_cast %98 : vector<1x1x1x5x9x4xf32> to vector<5x9x4xf32>
    %100 = tpu.concatenate %99, %99 in 2 : vector<5x9x4xf32>, vector<5x9x4xf32> -> vector<5x9x8xf32>
    %101 = vector.extract_strided_slice %100 {offsets = [0, 0, 0], sizes = [5, 8, 8], strides = [1, 1, 1]} : vector<5x9x8xf32> to vector<5x8x8xf32>
    %102 = vector.extract_strided_slice %100 {offsets = [0, 1, 0], sizes = [5, 8, 8], strides = [1, 1, 1]} : vector<5x9x8xf32> to vector<5x8x8xf32>
    %103 = vector.extract_strided_slice %101 {offsets = [0, 0, 0], sizes = [4, 8, 8], strides = [1, 1, 1]} : vector<5x8x8xf32> to vector<4x8x8xf32>
    %104 = vector.extract_strided_slice %0 {offsets = [1, 1, 0], sizes = [1, 1, 8], strides = [1, 1, 1]} : vector<4x4x8xf32> to vector<1x1x8xf32>
    %105 = vector.broadcast %104 : vector<1x1x8xf32> to vector<4x8x8xf32>
    %106 = arith.mulf %103, %105 : vector<4x8x8xf32>
    %107 = arith.addf %92, %106 : vector<4x8x8xf32>
    %108 = vector.extract_strided_slice %102 {offsets = [0, 0, 0], sizes = [4, 8, 8], strides = [1, 1, 1]} : vector<5x8x8xf32> to vector<4x8x8xf32>
    %109 = vector.extract_strided_slice %0 {offsets = [1, 3, 0], sizes = [1, 1, 8], strides = [1, 1, 1]} : vector<4x4x8xf32> to vector<1x1x8xf32>
    %110 = vector.broadcast %109 : vector<1x1x8xf32> to vector<4x8x8xf32>
    %111 = arith.mulf %108, %110 : vector<4x8x8xf32>
    %112 = arith.addf %107, %111 : vector<4x8x8xf32>
    %113 = vector.extract_strided_slice %101 {offsets = [1, 0, 0], sizes = [4, 8, 8], strides = [1, 1, 1]} : vector<5x8x8xf32> to vector<4x8x8xf32>
    %114 = vector.extract_strided_slice %0 {offsets = [3, 1, 0], sizes = [1, 1, 8], strides = [1, 1, 1]} : vector<4x4x8xf32> to vector<1x1x8xf32>
    %115 = vector.broadcast %114 : vector<1x1x8xf32> to vector<4x8x8xf32>
    %116 = arith.mulf %113, %115 : vector<4x8x8xf32>
    %117 = arith.addf %112, %116 : vector<4x8x8xf32>
    %118 = vector.extract_strided_slice %102 {offsets = [1, 0, 0], sizes = [4, 8, 8], strides = [1, 1, 1]} : vector<5x8x8xf32> to vector<4x8x8xf32>
    %119 = vector.extract_strided_slice %0 {offsets = [3, 3, 0], sizes = [1, 1, 8], strides = [1, 1, 1]} : vector<4x4x8xf32> to vector<1x1x8xf32>
    %120 = vector.broadcast %119 : vector<1x1x8xf32> to vector<4x8x8xf32>
    %121 = arith.mulf %118, %120 : vector<4x8x8xf32>
    %122 = arith.addf %117, %121 : vector<4x8x8xf32>
    %123 = vector.extract_strided_slice %101 {offsets = [0, 0, 0], sizes = [4, 8, 8], strides = [1, 1, 1]} : vector<5x8x8xf32> to vector<4x8x8xf32>
    %124 = vector.extract_strided_slice %1 {offsets = [0, 0, 0], sizes = [1, 1, 8], strides = [1, 1, 1]} : vector<2x2x8xf32> to vector<1x1x8xf32>
    %125 = vector.broadcast %124 : vector<1x1x8xf32> to vector<4x8x8xf32>
    %126 = arith.mulf %123, %125 : vector<4x8x8xf32>
    %127 = arith.addf %97, %126 : vector<4x8x8xf32>
    %128 = tpu.concatenate %122, %127 in 2 : vector<4x8x8xf32>, vector<4x8x8xf32> -> vector<4x8x16xf32>
    %129 = vector.shape_cast %128 : vector<4x8x16xf32> to vector<32x16xf32>
    %130 = arith.truncf %129 : vector<32x16xf32> to vector<32x16xbf16>
    %c0_32 = arith.constant 0 : index
    %c0_33 = arith.constant 0 : index
    %131 = vector.load %arg7[%c0_32, %c0_33] : memref<16x8xbf16, #tpu.memory_space<vmem>>, vector<16x8xbf16>
    %cst = arith.constant dense<0.000000e+00> : vector<32x8xf32>
    %132 = tpu.matmul %130, %131, %cst {dimension_numbers = #tpu.dot_dimension_numbers<[1], [0], [0], [1], [0, 0, 1, 1], [], []>} : vector<32x16xbf16>, vector<16x8xbf16>, vector<32x8xf32> -> vector<32x8xf32>
    %c0_34 = arith.constant 0 : index
    %c0_35 = arith.constant 0 : index
    %133 = vector.load %arg8[%c0_34, %c0_35] : memref<1x8xf32, #tpu.memory_space<vmem>>, vector<1x8xf32>
    %134 = vector.broadcast %133 : vector<1x8xf32> to vector<32x8xf32>
    %135 = arith.addf %132, %134 : vector<32x8xf32>
    %cst_36 = arith.constant 0.000000e+00 : f32
    %136 = vector.broadcast %cst_36 : f32 to vector<32x8xf32>
    %137 = arith.cmpf ogt, %135, %136 : vector<32x8xf32>
    %cst_37 = arith.constant 0.000000e+00 : f32
    %138 = vector.broadcast %cst_37 : f32 to vector<32x8xf32>
    %139 = arith.minimumf %135, %138 : vector<32x8xf32>
    %140 = math.exp %139 : vector<32x8xf32>
    %cst_38 = arith.constant 1.000000e+00 : f32
    %141 = vector.broadcast %cst_38 : f32 to vector<32x8xf32>
    %142 = arith.subf %140, %141 : vector<32x8xf32>
    %143 = arith.select %137, %135, %142 : vector<32x8xi1>, vector<32x8xf32>
    %144 = vector.shape_cast %143 : vector<32x8xf32> to vector<4x8x8xf32>
    %c0_39 = arith.constant 0 : index
    %c0_40 = arith.constant 0 : index
    %c0_41 = arith.constant 0 : index
    %c0_42 = arith.constant 0 : index
    %145 = vector.load %arg9[%c0_39, %c0_40, %c0_41, %c0_42] : memref<1x4x8x8xf32, #tpu.memory_space<vmem>>, vector<1x4x8x8xf32>
    %146 = vector.shape_cast %145 : vector<1x4x8x8xf32> to vector<4x8x8xf32>
    %147 = vector.shape_cast %144 : vector<4x8x8xf32> to vector<1x4x8x8xf32>
    tpu.vector_store %arg9[%c0_39, %c0_40, %c0_41, %c0_42], %147 {strides = array<i32>} : memref<1x4x8x8xf32, #tpu.memory_space<vmem>>, vector<1x4x8x8xf32>,
    return
  }
  func.func @transform_0(%arg0: i32, %arg1: i32) -> (i32, i32, i32, i32, i32, i32) {
    %c0_i32 = arith.constant 0 : i32
    %c0_i32_0 = arith.constant 0 : i32
    %c0_i32_1 = arith.constant 0 : i32
    %c0_i32_2 = arith.constant 0 : i32
    %c0_i32_3 = arith.constant 0 : i32
    return %arg0, %arg1, %c0_i32, %c0_i32_0, %c0_i32_1, %c0_i32_2 : i32, i32, i32, i32, i32, i32
  }
  func.func @transform_1(%arg0: i32, %arg1: i32) -> (i32, i32, i32) {
    %c0_i32 = arith.constant 0 : i32
    %c0_i32_0 = arith.constant 0 : i32
    %c0_i32_1 = arith.constant 0 : i32
    %c0_i32_2 = arith.constant 0 : i32
    return %c0_i32, %c0_i32_0, %c0_i32_1 : i32, i32, i32
  }
  func.func @transform_2(%arg0: i32, %arg1: i32) -> (i32, i32, i32) {
    %c0_i32 = arith.constant 0 : i32
    %c0_i32_0 = arith.constant 0 : i32
    %c0_i32_1 = arith.constant 0 : i32
    %c0_i32_2 = arith.constant 0 : i32
    return %c0_i32, %c0_i32_0, %c0_i32_1 : i32, i32, i32
  }
  func.func @transform_3(%arg0: i32, %arg1: i32) -> (i32, i32, i32) {
    %c0_i32 = arith.constant 0 : i32
    %c0_i32_0 = arith.constant 0 : i32
    %c0_i32_1 = arith.constant 0 : i32
    %c0_i32_2 = arith.constant 0 : i32
    return %c0_i32, %c0_i32_0, %c0_i32_1 : i32, i32, i32
  }
  func.func @transform_4(%arg0: i32, %arg1: i32) -> (i32, i32, i32) {
    %c0_i32 = arith.constant 0 : i32
    %c0_i32_0 = arith.constant 0 : i32
    %c0_i32_1 = arith.constant 0 : i32
    %c0_i32_2 = arith.constant 0 : i32
    return %c0_i32, %c0_i32_0, %c0_i32_1 : i32, i32, i32
  }
  func.func @transform_5(%arg0: i32, %arg1: i32) -> (i32, i32) {
    %c0_i32 = arith.constant 0 : i32
    %c0_i32_0 = arith.constant 0 : i32
    %c0_i32_1 = arith.constant 0 : i32
    return %c0_i32, %c0_i32_0 : i32, i32
  }
  func.func @transform_6(%arg0: i32, %arg1: i32) -> (i32, i32) {
    %c0_i32 = arith.constant 0 : i32
    %c0_i32_0 = arith.constant 0 : i32
    %c0_i32_1 = arith.constant 0 : i32
    return %c0_i32, %c0_i32_0 : i32, i32
  }
  func.func @transform_7(%arg0: i32, %arg1: i32) -> (i32, i32, i32, i32) {
    %c0_i32 = arith.constant 0 : i32
    %c0_i32_0 = arith.constant 0 : i32
    %c0_i32_1 = arith.constant 0 : i32
    return %arg0, %arg1, %c0_i32, %c0_i32_0 : i32, i32, i32, i32
  }
}

</mosaic_0001>

<llo_original>
// kernel: tpu_custom_call.1
$region0: #{tpu_custom_call.1}
  #allocation0 [shape = 'u32[]', space=smem, size = 0x4, offset = 0x4, fixed_abs, tag = 'smem constant byte address 0x4 - core index']
  #allocation1 [shape = 'u32[144,128]{1,0:T(1,128)}', space=vmem, size = 0x12000, scoped, tag = 'internal scratch']
  %s0 = inlined_call_operand.vmem [shape: f32[2,2,4,5,9,4], index: 0, kind: input, shape index: {}]
  %s1 = inlined_call_operand.vmem [shape: f32[4,4,8], index: 1, kind: input, shape index: {}]
  %s2 = inlined_call_operand.vmem [shape: f32[1,1,8], index: 2, kind: input, shape index: {}]
  %s3 = inlined_call_operand.vmem [shape: f32[2,2,8], index: 3, kind: input, shape index: {}]
  %s4 = inlined_call_operand.vmem [shape: f32[1,1,8], index: 4, kind: input, shape index: {}]
  %s5 = inlined_call_operand.vmem [shape: bf16[16,8], index: 5, kind: input, shape index: {}]
  %s6 = inlined_call_operand.vmem [shape: f32[1,8], index: 6, kind: input, shape index: {}]
  %s7 = inlined_call_operand.hbm [shape: f32[2,8,8,8], index: 7, kind: output, shape index: {}]
  %s8 = sld [smem:[#allocation0]]
  $region61: #{tpu_custom_call.1} parent=0
    _
  %s10 = ssub.s32 1, %s8
  %s11 = scalar_select 0, %s10, %s8
  $region1: #{tpu_custom_call.1} parent=0
    #allocation2 [shape = 'u8[32768]{0}', space=vmem, size = 0x8000, scoped, tag = 'output window, operand 0']
    #allocation3 [shape = 's32[2]{0}', space=sflag, size = 0x8, scoped, tag = 'scoped memory for tpu_custom_call.1']
    %12 = vsyncpa [#allocation3], 0
    %s13 = scalar_lea.sflag [#allocation3], 1
    %14 = vsyncpa %s13, 0
    loop: start=0, step=1, limit=6
    $region2: #{tpu_custom_call.1} parent=1 // loop_pre_header
      _
    $region3: #{tpu_custom_call.1} parent=1 // loop_header
      %s16 = sphi 0, %s20
      %p17 = scmp.ge.s32.totalorder %s16, 6
      %s23 = sphi 0, %s35
      %s24 = sphi 0, %s31
      %s25 = sphi 0, %s23
      %s26 = sphi 0, %s24
      %s27 = sphi 0, %s25
      %s28 = sphi 0, %s26
      %s40 = sphi 0, %s42
      %s43 = sphi 0, %s40
      %s44 = sphi 0, %s43
      %s60 = sphi 0, %s44
      %s64 = sphi 0, %s64
      %s66 = sphi 0, %s64
      %s67 = sphi 0, %s66
      %s81 = sphi 0, %s67
      %s85 = sphi 0, %s85
      %s87 = sphi 0, %s85
      %s88 = sphi 0, %s87
      %s102 = sphi 0, %s88
      %s106 = sphi 0, %s106
      %s108 = sphi 0, %s106
      %s109 = sphi 0, %s108
      %s123 = sphi 0, %s109
      %s127 = sphi 0, %s127
      %s129 = sphi 0, %s127
      %s130 = sphi 0, %s129
      %s144 = sphi 0, %s130
      %s148 = sphi 0, %s148
      %s150 = sphi 0, %s148
      %s151 = sphi 0, %s150
      %s165 = sphi 0, %s151
      %s169 = sphi 0, %s169
      %s171 = sphi 0, %s169
      %s172 = sphi 0, %s171
      %s186 = sphi 0, %s172
      %s194 = sphi 0, %s196
      %s197 = sphi 0, %s194
      %s198 = sphi 0, %s197
      %s214 = sphi 0, %s198
    $region4: #{tpu_custom_call.1} parent=1 // loop_header_branch
      %19 = sbr.rel (%p17) target = $region8
    $region5: #{tpu_custom_call.1} parent=1 // loop_body
      %s21 = ssub.s32 %s16, 1
      %s22 = ssub.s32 %s16, 2
      %s29 = sadd.s32 1, %s24
      %p30 = scmp.ge.s32.totalorder %s29, 2
      %s31 = scalar_select %p30, 0, %s29
      %s32 = sadd.s32 1, %s23
      %s33 = scalar_select %p30, %s32, %s23
      %p34 = scmp.ge.s32.totalorder %s33, 2
      %s35 = scalar_select %p34, 0, %s33
      %s36 = ssub.s32 %s23, %s35
      %s37 = ssub.s32 %s24, %s31
      %s38 = sor.u32 %s36, %s37
      %p39 = scmp.eq.s32.totalorder %s38, 0
      %s41 = sadd.s32 %s40, 1
      %s42 = scalar_select %p39, %s40, %s41
      %p45 = pneg %p39
      %p46 = scmp.eq.s32.totalorder %s16, 3
      %p47 = por %p45, %p46
      %p48 = scmp.ne.s32.totalorder %s40, %s43
      %p49 = scmp.eq.s32.totalorder %s16, 0
      %p50 = por %p48, %p49
      %p51 = scmp.ne.s32.totalorder %s40, %s43
      %p52 = scmp.eq.s32.totalorder %s21, 3
      %p53 = por %p51, %p52
      %p54 = scmp.ne.s32.totalorder %s43, %s44
      %p55 = scmp.eq.s32.totalorder %s21, 0
      %p56 = por %p54, %p55
      %p57 = scmp.ne.s32.totalorder %s43, %s44
      %p58 = scmp.eq.s32.totalorder %s22, 3
      %p59 = por %p57, %p58
      %p61 = scmp.ne.s32.totalorder %s44, %s60
      %p62 = scmp.eq.s32.totalorder %s22, 0
      %p63 = por %p61, %p62
      %s65 = sadd.s32 %s64, 1
      %p68 = scmp.eq.s32.totalorder %s16, 3
      %p69 = scmp.ne.s32.totalorder %s64, %s66
      %p70 = scmp.eq.s32.totalorder %s16, 0
      %p71 = por %p69, %p70
      %p72 = scmp.ne.s32.totalorder %s64, %s66
      %p73 = scmp.eq.s32.totalorder %s21, 3
      %p74 = por %p72, %p73
      %p75 = scmp.ne.s32.totalorder %s66, %s67
      %p76 = scmp.eq.s32.totalorder %s21, 0
      %p77 = por %p75, %p76
      %p78 = scmp.ne.s32.totalorder %s66, %s67
      %p79 = scmp.eq.s32.totalorder %s22, 3
      %p80 = por %p78, %p79
      %p82 = scmp.ne.s32.totalorder %s67, %s81
      %p83 = scmp.eq.s32.totalorder %s22, 0
      %p84 = por %p82, %p83
      %s86 = sadd.s32 %s85, 1
      %p89 = scmp.eq.s32.totalorder %s16, 3
      %p90 = scmp.ne.s32.totalorder %s85, %s87
      %p91 = scmp.eq.s32.totalorder %s16, 0
      %p92 = por %p90, %p91
      %p93 = scmp.ne.s32.totalorder %s85, %s87
      %p94 = scmp.eq.s32.totalorder %s21, 3
      %p95 = por %p93, %p94
      %p96 = scmp.ne.s32.totalorder %s87, %s88
      %p97 = scmp.eq.s32.totalorder %s21, 0
      %p98 = por %p96, %p97
      %p99 = scmp.ne.s32.totalorder %s87, %s88
      %p100 = scmp.eq.s32.totalorder %s22, 3
      %p101 = por %p99, %p100
      %p103 = scmp.ne.s32.totalorder %s88, %s102
      %p104 = scmp.eq.s32.totalorder %s22, 0
      %p105 = por %p103, %p104
      %s107 = sadd.s32 %s106, 1
      %p110 = scmp.eq.s32.totalorder %s16, 3
      %p111 = scmp.ne.s32.totalorder %s106, %s108
      %p112 = scmp.eq.s32.totalorder %s16, 0
      %p113 = por %p111, %p112
      %p114 = scmp.ne.s32.totalorder %s106, %s108
      %p115 = scmp.eq.s32.totalorder %s21, 3
      %p116 = por %p114, %p115
      %p117 = scmp.ne.s32.totalorder %s108, %s109
      %p118 = scmp.eq.s32.totalorder %s21, 0
      %p119 = por %p117, %p118
      %p120 = scmp.ne.s32.totalorder %s108, %s109
      %p121 = scmp.eq.s32.totalorder %s22, 3
      %p122 = por %p120, %p121
      %p124 = scmp.ne.s32.totalorder %s109, %s123
      %p125 = scmp.eq.s32.totalorder %s22, 0
      %p126 = por %p124, %p125
      %s128 = sadd.s32 %s127, 1
      %p131 = scmp.eq.s32.totalorder %s16, 3
      %p132 = scmp.ne.s32.totalorder %s127, %s129
      %p133 = scmp.eq.s32.totalorder %s16, 0
      %p134 = por %p132, %p133
      %p135 = scmp.ne.s32.totalorder %s127, %s129
      %p136 = scmp.eq.s32.totalorder %s21, 3
      %p137 = por %p135, %p136
      %p138 = scmp.ne.s32.totalorder %s129, %s130
      %p139 = scmp.eq.s32.totalorder %s21, 0
      %p140 = por %p138, %p139
      %p141 = scmp.ne.s32.totalorder %s129, %s130
      %p142 = scmp.eq.s32.totalorder %s22, 3
      %p143 = por %p141, %p142
      %p145 = scmp.ne.s32.totalorder %s130, %s144
      %p146 = scmp.eq.s32.totalorder %s22, 0
      %p147 = por %p145, %p146
      %s149 = sadd.s32 %s148, 1
      %p152 = scmp.eq.s32.totalorder %s16, 3
      %p153 = scmp.ne.s32.totalorder %s148, %s150
      %p154 = scmp.eq.s32.totalorder %s16, 0
      %p155 = por %p153, %p154
      %p156 = scmp.ne.s32.totalorder %s148, %s150
      %p157 = scmp.eq.s32.totalorder %s21, 3
      %p158 = por %p156, %p157
      %p159 = scmp.ne.s32.totalorder %s150, %s151
      %p160 = scmp.eq.s32.totalorder %s21, 0
      %p161 = por %p159, %p160
      %p162 = scmp.ne.s32.totalorder %s150, %s151
      %p163 = scmp.eq.s32.totalorder %s22, 3
      %p164 = por %p162, %p163
      %p166 = scmp.ne.s32.totalorder %s151, %s165
      %p167 = scmp.eq.s32.totalorder %s22, 0
      %p168 = por %p166, %p167
      %s170 = sadd.s32 %s169, 1
      %p173 = scmp.eq.s32.totalorder %s16, 3
      %p174 = scmp.ne.s32.totalorder %s169, %s171
      %p175 = scmp.eq.s32.totalorder %s16, 0
      %p176 = por %p174, %p175
      %p177 = scmp.ne.s32.totalorder %s169, %s171
      %p178 = scmp.eq.s32.totalorder %s21, 3
      %p179 = por %p177, %p178
      %p180 = scmp.ne.s32.totalorder %s171, %s172
      %p181 = scmp.eq.s32.totalorder %s21, 0
      %p182 = por %p180, %p181
      %p183 = scmp.ne.s32.totalorder %s171, %s172
      %p184 = scmp.eq.s32.totalorder %s22, 3
      %p185 = por %p183, %p184
      %p187 = scmp.ne.s32.totalorder %s172, %s186
      %p188 = scmp.eq.s32.totalorder %s22, 0
      %p189 = por %p187, %p188
      %s190 = ssub.s32 %s23, %s35
      %s191 = ssub.s32 %s24, %s31
      %s192 = sor.u32 %s190, %s191
      %p193 = scmp.eq.s32.totalorder %s192, 0
      %s195 = sadd.s32 %s194, 1
      %s196 = scalar_select %p193, %s194, %s195
      %p199 = pneg %p193
      %p200 = scmp.eq.s32.totalorder %s16, 3
      %p201 = por %p199, %p200
      %p202 = scmp.ne.s32.totalorder %s194, %s197
      %p203 = scmp.eq.s32.totalorder %s16, 0
      %p204 = por %p202, %p203
      %p205 = scmp.ne.s32.totalorder %s194, %s197
      %p206 = scmp.eq.s32.totalorder %s21, 3
      %p207 = por %p205, %p206
      %p208 = scmp.ne.s32.totalorder %s197, %s198
      %p209 = scmp.eq.s32.totalorder %s21, 0
      %p210 = por %p208, %p209
      %p211 = scmp.ne.s32.totalorder %s197, %s198
      %p212 = scmp.eq.s32.totalorder %s22, 3
      %p213 = por %p211, %p212
      %p215 = scmp.ne.s32.totalorder %s198, %s214
      %p216 = scmp.eq.s32.totalorder %s22, 0
      %p217 = por %p215, %p216
      %p218 = scmp.le.s32.totalorder 1, %s16
      %p219 = scmp.lt.s32.totalorder %s16, 5
      %p220 = pnand %p218, %p219
      %p221 = pneg %p220
      // Predicated region
      $region9: #{tpu_custom_call.1} parent=5 // pred_check
        _
      $region10: #{tpu_custom_call.1} parent=5 // pred_check_branch
        %223 = sbr.rel (%p220) target = $region12
      $region11: #{tpu_custom_call.1} parent=5 // pred_region
        %s224 = ssub.s32 %s16, 1
        // Predicated region
        $region13: #{tpu_custom_call.1} parent=11 // pred_check
          %p225 = pneg %p77
        $region14: #{tpu_custom_call.1} parent=11 // pred_check_branch
          %227 = sbr.rel (%p225) target = $region16
        $region15: #{tpu_custom_call.1} parent=11 // pred_region
          _
        $region16: #{tpu_custom_call.1} parent=11 // pred_fallthru
          _
        // Predicated region
        $region17: #{tpu_custom_call.1} parent=11 // pred_check
          %p228 = pneg %p98
        $region18: #{tpu_custom_call.1} parent=11 // pred_check_branch
          %230 = sbr.rel (%p228) target = $region20
        $region19: #{tpu_custom_call.1} parent=11 // pred_region
          _
        $region20: #{tpu_custom_call.1} parent=11 // pred_fallthru
          _
        // Predicated region
        $region21: #{tpu_custom_call.1} parent=11 // pred_check
          %p231 = pneg %p119
        $region22: #{tpu_custom_call.1} parent=11 // pred_check_branch
          %233 = sbr.rel (%p231) target = $region24
        $region23: #{tpu_custom_call.1} parent=11 // pred_region
          _
        $region24: #{tpu_custom_call.1} parent=11 // pred_fallthru
          _
        // Predicated region
        $region25: #{tpu_custom_call.1} parent=11 // pred_check
          %p234 = pneg %p140
        $region26: #{tpu_custom_call.1} parent=11 // pred_check_branch
          %236 = sbr.rel (%p234) target = $region28
        $region27: #{tpu_custom_call.1} parent=11 // pred_region
          _
        $region28: #{tpu_custom_call.1} parent=11 // pred_fallthru
          _
        // Predicated region
        $region29: #{tpu_custom_call.1} parent=11 // pred_check
          %p237 = pneg %p161
        $region30: #{tpu_custom_call.1} parent=11 // pred_check_branch
          %239 = sbr.rel (%p237) target = $region32
        $region31: #{tpu_custom_call.1} parent=11 // pred_region
          _
        $region32: #{tpu_custom_call.1} parent=11 // pred_fallthru
          _
        // Predicated region
        $region33: #{tpu_custom_call.1} parent=11 // pred_check
          %p240 = pneg %p182
        $region34: #{tpu_custom_call.1} parent=11 // pred_check_branch
          %242 = sbr.rel (%p240) target = $region36
        $region35: #{tpu_custom_call.1} parent=11 // pred_region
          _
        $region36: #{tpu_custom_call.1} parent=11 // pred_fallthru
          _
      $region12: #{tpu_custom_call.1} parent=5 // pred_fallthru
        _
      %p243 = scmp.lt.s32.totalorder %s16, 4
      // Predicated region
      $region37: #{tpu_custom_call.1} parent=5 // pred_check
        %p244 = pneg %p243
      $region38: #{tpu_custom_call.1} parent=5 // pred_check_branch
        %246 = sbr.rel (%p244) target = $region40
      $region39: #{tpu_custom_call.1} parent=5 // pred_region
        // Predicated region
        $region41: #{tpu_custom_call.1} parent=39 // pred_check
          %p247 = pneg %p50
        $region42: #{tpu_custom_call.1} parent=39 // pred_check_branch
          %249 = sbr.rel (%p247) target = $region44
        $region43: #{tpu_custom_call.1} parent=39 // pred_region
          %p250 = scmp.lt.s32.totalorder %s23, 1
          %s251 = scalar_select %p250, %s23, 1
          %p252 = scmp.lt.s32.totalorder %s24, 1
          %s253 = scalar_select %p252, %s24, 1
          %s254 = smul.addr %s253, 40
          %s255 = smul.addr %s251, 80
          %s256 = sadd.s32 %s254, %s255
          %s257 = smul.addr %s256, 8
          %s258 = scalar_lea.vmem %s0, %s257
        $region44: #{tpu_custom_call.1} parent=39 // pred_fallthru
          _
      $region40: #{tpu_custom_call.1} parent=5 // pred_fallthru
        _
      %p259 = scmp.le.s32.totalorder 1, %s16
      %p260 = scmp.lt.s32.totalorder %s16, 5
      %p261 = pnand %p259, %p260
      %p262 = pneg %p261
      // Predicated region
      $region45: #{tpu_custom_call.1} parent=5 // pred_check
        _
      $region46: #{tpu_custom_call.1} parent=5 // pred_check_branch
        %264 = sbr.rel (%p261) target = $region48
      $region47: #{tpu_custom_call.1} parent=5 // pred_region
        %s265 = ssub.s32 %s16, 1
        %p266 = scmp.lt.s32.totalorder %s25, 1
        %s267 = scalar_select %p266, %s25, 1
        %p268 = scmp.lt.s32.totalorder %s26, 1
        %s269 = scalar_select %p268, %s26, 1
        %s270 = smul.addr %s269, 40
        %s271 = smul.addr %s267, 80
        %s272 = sadd.s32 %s270, %s271
        %s273 = smul.addr %s272, 8
        %s274 = scalar_lea.vmem %s0, %s273
        %p275 = pneg %p56
        %p276 = pneg %p53
        %p277 = pneg %p77
        %p278 = pneg %p74
        %p279 = pneg %p98
        %p280 = pneg %p95
        %p281 = pneg %p119
        %p282 = pneg %p116
        %p283 = pneg %p140
        %p284 = pneg %p137
        %p285 = pneg %p161
        %p286 = pneg %p158
        %p287 = pneg %p182
        %p288 = pneg %p179
        %p289 = pneg %p210
        %p290 = pneg %p207
        %s291 = sand.u32 %s197, 1
        %s292 = scalar_lea.sflag [#allocation3], %s291
        %s293 = sand.u32 %s197, 1
        %s294 = smul.addr %s293, 32
        %s295 = scalar_lea.vmem [#allocation2], %s294
        %p296 = scmp.lt.s32.totalorder %s25, 1
        %s297 = scalar_select %p296, %s25, 1
        %p298 = scmp.lt.s32.totalorder %s26, 1
        %s299 = scalar_select %p298, %s26, 1
        %s300 = smul.addr %s299, 40
        %s301 = smul.addr %s297, 80
        %s302 = sadd.s32 %s300, %s301
        %s303 = smul.addr %s302, 8
        %s304 = scalar_lea.vmem %s0, %s303
        %s305 = smul.u32 4, %s26
        %v307 = vld [vmem:[%s1] sm:$0xf]
        %v308 = vld [vmem:[%s1 + $0x4] sm:$0xf]
        %v309 = vld [vmem:[%s1 + $0x8] sm:$0xf]
        %v310 = vld [vmem:[%s1 + $0xc] sm:$0xf]
        %v311 = vld [vmem:[%s3] sm:$0x3]
        %v312 = vld [vmem:[%s3 + $0x2] sm:$0x3]
        %v313 = vld [vmem:[%s2] sm:$0x1]
        %v315 = vlaneseq
        %v316 = vshrl.u32 %v315, 7
        %v317 = vsub.s32 0, %v316
        %v318 = vrot.slane %v313, %v317
        %v320 = vld [vmem:[%s4] sm:$0x1]
        %v322 = vlaneseq
        %v323 = vshrl.u32 %v322, 7
        %v324 = vsub.s32 0, %v323
        %v325 = vrot.slane %v320, %v324
        %v327 = vld [vmem:[%s304] sm:$0xff]
        %v328 = vld [vmem:[%s304 + $0x8] sm:$0x1]
        %v329 = vld [vmem:[%s304 + $0x10] sm:$0xff]
        %v330 = vld [vmem:[%s304 + $0x18] sm:$0x1]
        %v331 = vld [vmem:[%s304 + $0x20] sm:$0xff]
        %v332 = vld [vmem:[%s304 + $0x28] sm:$0x1]
        %v333 = vld [vmem:[%s304 + $0x30] sm:$0xff]
        %v334 = vld [vmem:[%s304 + $0x38] sm:$0x1]
        %v335 = vld [vmem:[%s304 + $0x40] sm:$0xff]
        %v336 = vld [vmem:[%s304 + $0x48] sm:$0x1]
        %347 = vrot.lane.b32.xlu0 %v327, 4
        %v348 = vpop.permute.xlu0 %347
        %349 = vrot.lane.b32.xlu0 %v328, 4
        %v350 = vpop.permute.xlu0 %349
        %351 = vrot.lane.b32.xlu0 %v329, 4
        %v352 = vpop.permute.xlu0 %351
        %353 = vrot.lane.b32.xlu0 %v330, 4
        %v354 = vpop.permute.xlu0 %353
        %355 = vrot.lane.b32.xlu0 %v331, 4
        %v356 = vpop.permute.xlu0 %355
        %357 = vrot.lane.b32.xlu0 %v332, 4
        %v358 = vpop.permute.xlu0 %357
        %359 = vrot.lane.b32.xlu0 %v333, 4
        %v360 = vpop.permute.xlu0 %359
        %361 = vrot.lane.b32.xlu0 %v334, 4
        %v362 = vpop.permute.xlu0 %361
        %363 = vrot.lane.b32.xlu0 %v335, 4
        %v364 = vpop.permute.xlu0 %363
        %365 = vrot.lane.b32.xlu0 %v336, 4
        %v366 = vpop.permute.xlu0 %365
        %vm377 = vcmask 31744
        %v378 = vsel %vm377, %v327, %v348
        %v379 = vsel %vm377, %v328, %v350
        %v380 = vsel %vm377, %v329, %v352
        %v381 = vsel %vm377, %v330, %v354
        %v382 = vsel %vm377, %v331, %v356
        %v383 = vsel %vm377, %v332, %v358
        %v384 = vsel %vm377, %v333, %v360
        %v385 = vsel %vm377, %v334, %v362
        %v386 = vsel %vm377, %v335, %v364
        %v387 = vsel %vm377, %v336, %v366
        %v388 = vlaneseq
        %v389 = vshrl.u32 %v388, 7
        %v390 = vsub.s32 0, %v389
        %v391 = vrot.slane %v307, %v390
        %v392 = vmul.f32 %v378, %v391
        %v393 = vmul.f32 %v380, %v391
        %v394 = vmul.f32 %v382, %v391
        %v395 = vmul.f32 %v384, %v391
        %v396 = vadd.f32 %v318, %v392
        %v397 = vadd.f32 %v318, %v393
        %v398 = vadd.f32 %v318, %v394
        %v399 = vadd.f32 %v318, %v395
        %v400 = vlaneseq
        %v401 = vshrl.u32 %v400, 7
        %v402 = vsub.s32 2, %v401
        %v403 = vrot.slane %v307, %v402
        %v404 = vmul.f32 %v378, %v403
        %v405 = vmul.f32 %v379, %v403
        %v406 = vmul.f32 %v380, %v403
        %v407 = vmul.f32 %v381, %v403
        %v408 = vmul.f32 %v382, %v403
        %v409 = vmul.f32 %v383, %v403
        %v410 = vmul.f32 %v384, %v403
        %v411 = vmul.f32 %v385, %v403
        %vm420 = vcmask 1046528
        %v421 = vrot.slane %v404, 1
        %v422 = vrot.slane %v405, 1
        %v423 = vsel %vm420, %v421, %v422
        %v424 = vrot.slane %v406, 1
        %v425 = vrot.slane %v407, 1
        %v426 = vsel %vm420, %v424, %v425
        %v427 = vrot.slane %v408, 1
        %v428 = vrot.slane %v409, 1
        %v429 = vsel %vm420, %v427, %v428
        %v430 = vrot.slane %v410, 1
        %v431 = vrot.slane %v411, 1
        %v432 = vsel %vm420, %v430, %v431
        %v437 = vadd.f32 %v396, %v423
        %v438 = vadd.f32 %v397, %v426
        %v439 = vadd.f32 %v398, %v429
        %v440 = vadd.f32 %v399, %v432
        %v441 = vlaneseq
        %v442 = vshrl.u32 %v441, 7
        %v443 = vsub.s32 0, %v442
        %v444 = vrot.slane %v309, %v443
        %v445 = vmul.f32 %v380, %v444
        %v446 = vmul.f32 %v382, %v444
        %v447 = vmul.f32 %v384, %v444
        %v448 = vmul.f32 %v386, %v444
        %v449 = vadd.f32 %v437, %v445
        %v450 = vadd.f32 %v438, %v446
        %v451 = vadd.f32 %v439, %v447
        %v452 = vadd.f32 %v440, %v448
        %v453 = vlaneseq
        %v454 = vshrl.u32 %v453, 7
        %v455 = vsub.s32 2, %v454
        %v456 = vrot.slane %v309, %v455
        %v457 = vmul.f32 %v380, %v456
        %v458 = vmul.f32 %v381, %v456
        %v459 = vmul.f32 %v382, %v456
        %v460 = vmul.f32 %v383, %v456
        %v461 = vmul.f32 %v384, %v456
        %v462 = vmul.f32 %v385, %v456
        %v463 = vmul.f32 %v386, %v456
        %v464 = vmul.f32 %v387, %v456
        %v473 = vrot.slane %v457, 1
        %v474 = vrot.slane %v458, 1
        %v475 = vsel %vm420, %v473, %v474
        %v476 = vrot.slane %v459, 1
        %v477 = vrot.slane %v460, 1
        %v478 = vsel %vm420, %v476, %v477
        %v479 = vrot.slane %v461, 1
        %v480 = vrot.slane %v462, 1
        %v481 = vsel %vm420, %v479, %v480
        %v482 = vrot.slane %v463, 1
        %v483 = vrot.slane %v464, 1
        %v484 = vsel %vm420, %v482, %v483
        %v489 = vadd.f32 %v449, %v475
        %v490 = vadd.f32 %v450, %v478
        %v491 = vadd.f32 %v451, %v481
        %v492 = vadd.f32 %v452, %v484
        %v493 = vlaneseq
        %v494 = vshrl.u32 %v493, 7
        %v495 = vsub.s32 1, %v494
        %v496 = vrot.slane %v312, %v495
        %v497 = vmul.f32 %v380, %v496
        %v498 = vmul.f32 %v381, %v496
        %v499 = vmul.f32 %v382, %v496
        %v500 = vmul.f32 %v383, %v496
        %v501 = vmul.f32 %v384, %v496
        %v502 = vmul.f32 %v385, %v496
        %v503 = vmul.f32 %v386, %v496
        %v504 = vmul.f32 %v387, %v496
        %v505 = vadd.f32 %v325, %v497
        %v506 = vadd.f32 %v325, %v498
        %v507 = vadd.f32 %v325, %v499
        %v508 = vadd.f32 %v325, %v500
        %v509 = vadd.f32 %v325, %v501
        %v510 = vadd.f32 %v325, %v502
        %v511 = vadd.f32 %v325, %v503
        %v512 = vadd.f32 %v325, %v504
        %s513 = scalar_lea.vmem %s304, 80
        %v514 = vld [vmem:[%s513] sm:$0xff]
        %v515 = vld [vmem:[%s513 + $0x8] sm:$0x1]
        %v516 = vld [vmem:[%s513 + $0x10] sm:$0xff]
        %v517 = vld [vmem:[%s513 + $0x18] sm:$0x1]
        %v518 = vld [vmem:[%s513 + $0x20] sm:$0xff]
        %v519 = vld [vmem:[%s513 + $0x28] sm:$0x1]
        %v520 = vld [vmem:[%s513 + $0x30] sm:$0xff]
        %v521 = vld [vmem:[%s513 + $0x38] sm:$0x1]
        %v522 = vld [vmem:[%s513 + $0x40] sm:$0xff]
        %v523 = vld [vmem:[%s513 + $0x48] sm:$0x1]
        %534 = vrot.lane.b32.xlu0 %v514, 4
        %v535 = vpop.permute.xlu0 %534
        %536 = vrot.lane.b32.xlu0 %v515, 4
        %v537 = vpop.permute.xlu0 %536
        %538 = vrot.lane.b32.xlu0 %v516, 4
        %v539 = vpop.permute.xlu0 %538
        %540 = vrot.lane.b32.xlu0 %v517, 4
        %v541 = vpop.permute.xlu0 %540
        %542 = vrot.lane.b32.xlu0 %v518, 4
        %v543 = vpop.permute.xlu0 %542
        %544 = vrot.lane.b32.xlu0 %v519, 4
        %v545 = vpop.permute.xlu0 %544
        %546 = vrot.lane.b32.xlu0 %v520, 4
        %v547 = vpop.permute.xlu0 %546
        %548 = vrot.lane.b32.xlu0 %v521, 4
        %v549 = vpop.permute.xlu0 %548
        %550 = vrot.lane.b32.xlu0 %v522, 4
        %v551 = vpop.permute.xlu0 %550
        %552 = vrot.lane.b32.xlu0 %v523, 4
        %v553 = vpop.permute.xlu0 %552
        %v564 = vsel %vm377, %v514, %v535
        %v565 = vsel %vm377, %v515, %v537
        %v566 = vsel %vm377, %v516, %v539
        %v567 = vsel %vm377, %v517, %v541
        %v568 = vsel %vm377, %v518, %v543
        %v569 = vsel %vm377, %v519, %v545
        %v570 = vsel %vm377, %v520, %v547
        %v571 = vsel %vm377, %v521, %v549
        %v572 = vsel %vm377, %v522, %v551
        %v573 = vsel %vm377, %v523, %v553
        %v574 = vlaneseq
        %v575 = vshrl.u32 %v574, 7
        %v576 = vsub.s32 1, %v575
        %v577 = vrot.slane %v307, %v576
        %v578 = vmul.f32 %v564, %v577
        %v579 = vmul.f32 %v566, %v577
        %v580 = vmul.f32 %v568, %v577
        %v581 = vmul.f32 %v570, %v577
        %v582 = vadd.f32 %v489, %v578
        %v583 = vadd.f32 %v490, %v579
        %v584 = vadd.f32 %v491, %v580
        %v585 = vadd.f32 %v492, %v581
        %v586 = vlaneseq
        %v587 = vshrl.u32 %v586, 7
        %v588 = vsub.s32 3, %v587
        %v589 = vrot.slane %v307, %v588
        %v590 = vmul.f32 %v564, %v589
        %v591 = vmul.f32 %v565, %v589
        %v592 = vmul.f32 %v566, %v589
        %v593 = vmul.f32 %v567, %v589
        %v594 = vmul.f32 %v568, %v589
        %v595 = vmul.f32 %v569, %v589
        %v596 = vmul.f32 %v570, %v589
        %v597 = vmul.f32 %v571, %v589
        %v606 = vrot.slane %v590, 1
        %v607 = vrot.slane %v591, 1
        %v608 = vsel %vm420, %v606, %v607
        %v609 = vrot.slane %v592, 1
        %v610 = vrot.slane %v593, 1
        %v611 = vsel %vm420, %v609, %v610
        %v612 = vrot.slane %v594, 1
        %v613 = vrot.slane %v595, 1
        %v614 = vsel %vm420, %v612, %v613
        %v615 = vrot.slane %v596, 1
        %v616 = vrot.slane %v597, 1
        %v617 = vsel %vm420, %v615, %v616
        %v622 = vadd.f32 %v582, %v608
        %v623 = vadd.f32 %v583, %v611
        %v624 = vadd.f32 %v584, %v614
        %v625 = vadd.f32 %v585, %v617
        %v626 = vlaneseq
        %v627 = vshrl.u32 %v626, 7
        %v628 = vsub.s32 1, %v627
        %v629 = vrot.slane %v309, %v628
        %v630 = vmul.f32 %v566, %v629
        %v631 = vmul.f32 %v568, %v629
        %v632 = vmul.f32 %v570, %v629
        %v633 = vmul.f32 %v572, %v629
        %v634 = vadd.f32 %v622, %v630
        %v635 = vadd.f32 %v623, %v631
        %v636 = vadd.f32 %v624, %v632
        %v637 = vadd.f32 %v625, %v633
        %v638 = vlaneseq
        %v639 = vshrl.u32 %v638, 7
        %v640 = vsub.s32 3, %v639
        %v641 = vrot.slane %v309, %v640
        %v642 = vmul.f32 %v566, %v641
        %v643 = vmul.f32 %v567, %v641
        %v644 = vmul.f32 %v568, %v641
        %v645 = vmul.f32 %v569, %v641
        %v646 = vmul.f32 %v570, %v641
        %v647 = vmul.f32 %v571, %v641
        %v648 = vmul.f32 %v572, %v641
        %v649 = vmul.f32 %v573, %v641
        %v658 = vrot.slane %v642, 1
        %v659 = vrot.slane %v643, 1
        %v660 = vsel %vm420, %v658, %v659
        %v661 = vrot.slane %v644, 1
        %v662 = vrot.slane %v645, 1
        %v663 = vsel %vm420, %v661, %v662
        %v664 = vrot.slane %v646, 1
        %v665 = vrot.slane %v647, 1
        %v666 = vsel %vm420, %v664, %v665
        %v667 = vrot.slane %v648, 1
        %v668 = vrot.slane %v649, 1
        %v669 = vsel %vm420, %v667, %v668
        %v674 = vadd.f32 %v634, %v660
        %v675 = vadd.f32 %v635, %v663
        %v676 = vadd.f32 %v636, %v666
        %v677 = vadd.f32 %v637, %v669
        %v678 = vlaneseq
        %v679 = vshrl.u32 %v678, 7
        %v680 = vsub.s32 0, %v679
        %v681 = vrot.slane %v312, %v680
        %v682 = vmul.f32 %v566, %v681
        %v683 = vmul.f32 %v568, %v681
        %v684 = vmul.f32 %v570, %v681
        %v685 = vmul.f32 %v572, %v681
        %v690 = vrot.slane %v682, 7
        %v691 = vrot.slane %v683, 7
        %v692 = vrot.slane %v684, 7
        %v693 = vrot.slane %v685, 7
        %v698 = vadd.f32 %v505, %v690
        %v699 = vadd.f32 %v506, %v690
        %v700 = vadd.f32 %v507, %v691
        %v701 = vadd.f32 %v508, %v691
        %v702 = vadd.f32 %v509, %v692
        %v703 = vadd.f32 %v510, %v692
        %v704 = vadd.f32 %v511, %v693
        %v705 = vadd.f32 %v512, %v693
        %s706 = scalar_lea.vmem %s304, 160
        %v707 = vld [vmem:[%s706] sm:$0xff]
        %v708 = vld [vmem:[%s706 + $0x8] sm:$0x1]
        %v709 = vld [vmem:[%s706 + $0x10] sm:$0xff]
        %v710 = vld [vmem:[%s706 + $0x18] sm:$0x1]
        %v711 = vld [vmem:[%s706 + $0x20] sm:$0xff]
        %v712 = vld [vmem:[%s706 + $0x28] sm:$0x1]
        %v713 = vld [vmem:[%s706 + $0x30] sm:$0xff]
        %v714 = vld [vmem:[%s706 + $0x38] sm:$0x1]
        %v715 = vld [vmem:[%s706 + $0x40] sm:$0xff]
        %v716 = vld [vmem:[%s706 + $0x48] sm:$0x1]
        %727 = vrot.lane.b32.xlu0 %v707, 4
        %v728 = vpop.permute.xlu0 %727
        %729 = vrot.lane.b32.xlu0 %v708, 4
        %v730 = vpop.permute.xlu0 %729
        %731 = vrot.lane.b32.xlu0 %v709, 4
        %v732 = vpop.permute.xlu0 %731
        %733 = vrot.lane.b32.xlu0 %v710, 4
        %v734 = vpop.permute.xlu0 %733
        %735 = vrot.lane.b32.xlu0 %v711, 4
        %v736 = vpop.permute.xlu0 %735
        %737 = vrot.lane.b32.xlu0 %v712, 4
        %v738 = vpop.permute.xlu0 %737
        %739 = vrot.lane.b32.xlu0 %v713, 4
        %v740 = vpop.permute.xlu0 %739
        %741 = vrot.lane.b32.xlu0 %v714, 4
        %v742 = vpop.permute.xlu0 %741
        %743 = vrot.lane.b32.xlu0 %v715, 4
        %v744 = vpop.permute.xlu0 %743
        %745 = vrot.lane.b32.xlu0 %v716, 4
        %v746 = vpop.permute.xlu0 %745
        %v757 = vsel %vm377, %v707, %v728
        %v758 = vsel %vm377, %v708, %v730
        %v759 = vsel %vm377, %v709, %v732
        %v760 = vsel %vm377, %v710, %v734
        %v761 = vsel %vm377, %v711, %v736
        %v762 = vsel %vm377, %v712, %v738
        %v763 = vsel %vm377, %v713, %v740
        %v764 = vsel %vm377, %v714, %v742
        %v765 = vsel %vm377, %v715, %v744
        %v766 = vsel %vm377, %v716, %v746
        %v767 = vlaneseq
        %v768 = vshrl.u32 %v767, 7
        %v769 = vsub.s32 0, %v768
        %v770 = vrot.slane %v308, %v769
        %v771 = vmul.f32 %v757, %v770
        %v772 = vmul.f32 %v759, %v770
        %v773 = vmul.f32 %v761, %v770
        %v774 = vmul.f32 %v763, %v770
        %v775 = vadd.f32 %v674, %v771
        %v776 = vadd.f32 %v675, %v772
        %v777 = vadd.f32 %v676, %v773
        %v778 = vadd.f32 %v677, %v774
        %v779 = vlaneseq
        %v780 = vshrl.u32 %v779, 7
        %v781 = vsub.s32 2, %v780
        %v782 = vrot.slane %v308, %v781
        %v783 = vmul.f32 %v757, %v782
        %v784 = vmul.f32 %v758, %v782
        %v785 = vmul.f32 %v759, %v782
        %v786 = vmul.f32 %v760, %v782
        %v787 = vmul.f32 %v761, %v782
        %v788 = vmul.f32 %v762, %v782
        %v789 = vmul.f32 %v763, %v782
        %v790 = vmul.f32 %v764, %v782
        %v799 = vrot.slane %v783, 1
        %v800 = vrot.slane %v784, 1
        %v801 = vsel %vm420, %v799, %v800
        %v802 = vrot.slane %v785, 1
        %v803 = vrot.slane %v786, 1
        %v804 = vsel %vm420, %v802, %v803
        %v805 = vrot.slane %v787, 1
        %v806 = vrot.slane %v788, 1
        %v807 = vsel %vm420, %v805, %v806
        %v808 = vrot.slane %v789, 1
        %v809 = vrot.slane %v790, 1
        %v810 = vsel %vm420, %v808, %v809
        %v815 = vadd.f32 %v775, %v801
        %v816 = vadd.f32 %v776, %v804
        %v817 = vadd.f32 %v777, %v807
        %v818 = vadd.f32 %v778, %v810
        %v819 = vlaneseq
        %v820 = vshrl.u32 %v819, 7
        %v821 = vsub.s32 0, %v820
        %v822 = vrot.slane %v310, %v821
        %v823 = vmul.f32 %v759, %v822
        %v824 = vmul.f32 %v761, %v822
        %v825 = vmul.f32 %v763, %v822
        %v826 = vmul.f32 %v765, %v822
        %v827 = vadd.f32 %v815, %v823
        %v828 = vadd.f32 %v816, %v824
        %v829 = vadd.f32 %v817, %v825
        %v830 = vadd.f32 %v818, %v826
        %v831 = vlaneseq
        %v832 = vshrl.u32 %v831, 7
        %v833 = vsub.s32 2, %v832
        %v834 = vrot.slane %v310, %v833
        %v835 = vmul.f32 %v759, %v834
        %v836 = vmul.f32 %v760, %v834
        %v837 = vmul.f32 %v761, %v834
        %v838 = vmul.f32 %v762, %v834
        %v839 = vmul.f32 %v763, %v834
        %v840 = vmul.f32 %v764, %v834
        %v841 = vmul.f32 %v765, %v834
        %v842 = vmul.f32 %v766, %v834
        %v851 = vrot.slane %v835, 1
        %v852 = vrot.slane %v836, 1
        %v853 = vsel %vm420, %v851, %v852
        %v854 = vrot.slane %v837, 1
        %v855 = vrot.slane %v838, 1
        %v856 = vsel %vm420, %v854, %v855
        %v857 = vrot.slane %v839, 1
        %v858 = vrot.slane %v840, 1
        %v859 = vsel %vm420, %v857, %v858
        %v860 = vrot.slane %v841, 1
        %v861 = vrot.slane %v842, 1
        %v862 = vsel %vm420, %v860, %v861
        %v867 = vadd.f32 %v827, %v853
        %v868 = vadd.f32 %v828, %v856
        %v869 = vadd.f32 %v829, %v859
        %v870 = vadd.f32 %v830, %v862
        %v871 = vlaneseq
        %v872 = vshrl.u32 %v871, 7
        %v873 = vsub.s32 1, %v872
        %v874 = vrot.slane %v311, %v873
        %v875 = vmul.f32 %v757, %v874
        %v876 = vmul.f32 %v758, %v874
        %v877 = vmul.f32 %v759, %v874
        %v878 = vmul.f32 %v760, %v874
        %v879 = vmul.f32 %v761, %v874
        %v880 = vmul.f32 %v762, %v874
        %v881 = vmul.f32 %v763, %v874
        %v882 = vmul.f32 %v764, %v874
        %v883 = vadd.f32 %v698, %v875
        %v884 = vadd.f32 %v699, %v876
        %v885 = vadd.f32 %v700, %v877
        %v886 = vadd.f32 %v701, %v878
        %v887 = vadd.f32 %v702, %v879
        %v888 = vadd.f32 %v703, %v880
        %v889 = vadd.f32 %v704, %v881
        %v890 = vadd.f32 %v705, %v882
        %s891 = scalar_lea.vmem %s304, 240
        %v892 = vld [vmem:[%s891] sm:$0xff]
        %v893 = vld [vmem:[%s891 + $0x8] sm:$0x1]
        %v894 = vld [vmem:[%s891 + $0x10] sm:$0xff]
        %v895 = vld [vmem:[%s891 + $0x18] sm:$0x1]
        %v896 = vld [vmem:[%s891 + $0x20] sm:$0xff]
        %v897 = vld [vmem:[%s891 + $0x28] sm:$0x1]
        %v898 = vld [vmem:[%s891 + $0x30] sm:$0xff]
        %v899 = vld [vmem:[%s891 + $0x38] sm:$0x1]
        %v900 = vld [vmem:[%s891 + $0x40] sm:$0xff]
        %v901 = vld [vmem:[%s891 + $0x48] sm:$0x1]
        %912 = vrot.lane.b32.xlu0 %v892, 4
        %v913 = vpop.permute.xlu0 %912
        %914 = vrot.lane.b32.xlu0 %v893, 4
        %v915 = vpop.permute.xlu0 %914
        %916 = vrot.lane.b32.xlu0 %v894, 4
        %v917 = vpop.permute.xlu0 %916
        %918 = vrot.lane.b32.xlu0 %v895, 4
        %v919 = vpop.permute.xlu0 %918
        %920 = vrot.lane.b32.xlu0 %v896, 4
        %v921 = vpop.permute.xlu0 %920
        %922 = vrot.lane.b32.xlu0 %v897, 4
        %v923 = vpop.permute.xlu0 %922
        %924 = vrot.lane.b32.xlu0 %v898, 4
        %v925 = vpop.permute.xlu0 %924
        %926 = vrot.lane.b32.xlu0 %v899, 4
        %v927 = vpop.permute.xlu0 %926
        %928 = vrot.lane.b32.xlu0 %v900, 4
        %v929 = vpop.permute.xlu0 %928
        %930 = vrot.lane.b32.xlu0 %v901, 4
        %v931 = vpop.permute.xlu0 %930
        %v942 = vsel %vm377, %v892, %v913
        %v943 = vsel %vm377, %v893, %v915
        %v944 = vsel %vm377, %v894, %v917
        %v945 = vsel %vm377, %v895, %v919
        %v946 = vsel %vm377, %v896, %v921
        %v947 = vsel %vm377, %v897, %v923
        %v948 = vsel %vm377, %v898, %v925
        %v949 = vsel %vm377, %v899, %v927
        %v950 = vsel %vm377, %v900, %v929
        %v951 = vsel %vm377, %v901, %v931
        %v952 = vlaneseq
        %v953 = vshrl.u32 %v952, 7
        %v954 = vsub.s32 1, %v953
        %v955 = vrot.slane %v308, %v954
        %v956 = vmul.f32 %v942, %v955
        %v957 = vmul.f32 %v944, %v955
        %v958 = vmul.f32 %v946, %v955
        %v959 = vmul.f32 %v948, %v955
        %v960 = vadd.f32 %v867, %v956
        %v961 = vadd.f32 %v868, %v957
        %v962 = vadd.f32 %v869, %v958
        %v963 = vadd.f32 %v870, %v959
        %v964 = vlaneseq
        %v965 = vshrl.u32 %v964, 7
        %v966 = vsub.s32 3, %v965
        %v967 = vrot.slane %v308, %v966
        %v968 = vmul.f32 %v942, %v967
        %v969 = vmul.f32 %v943, %v967
        %v970 = vmul.f32 %v944, %v967
        %v971 = vmul.f32 %v945, %v967
        %v972 = vmul.f32 %v946, %v967
        %v973 = vmul.f32 %v947, %v967
        %v974 = vmul.f32 %v948, %v967
        %v975 = vmul.f32 %v949, %v967
        %v984 = vrot.slane %v968, 1
        %v985 = vrot.slane %v969, 1
        %v986 = vsel %vm420, %v984, %v985
        %v987 = vrot.slane %v970, 1
        %v988 = vrot.slane %v971, 1
        %v989 = vsel %vm420, %v987, %v988
        %v990 = vrot.slane %v972, 1
        %v991 = vrot.slane %v973, 1
        %v992 = vsel %vm420, %v990, %v991
        %v993 = vrot.slane %v974, 1
        %v994 = vrot.slane %v975, 1
        %v995 = vsel %vm420, %v993, %v994
        %v1000 = vadd.f32 %v960, %v986
        %v1001 = vadd.f32 %v961, %v989
        %v1002 = vadd.f32 %v962, %v992
        %v1003 = vadd.f32 %v963, %v995
        %v1004 = vlaneseq
        %v1005 = vshrl.u32 %v1004, 7
        %v1006 = vsub.s32 1, %v1005
        %v1007 = vrot.slane %v310, %v1006
        %v1008 = vmul.f32 %v944, %v1007
        %v1009 = vmul.f32 %v946, %v1007
        %v1010 = vmul.f32 %v948, %v1007
        %v1011 = vmul.f32 %v950, %v1007
        %v1012 = vadd.f32 %v1000, %v1008
        %v1013 = vadd.f32 %v1001, %v1009
        %v1014 = vadd.f32 %v1002, %v1010
        %v1015 = vadd.f32 %v1003, %v1011
        %v1016 = vlaneseq
        %v1017 = vshrl.u32 %v1016, 7
        %v1018 = vsub.s32 3, %v1017
        %v1019 = vrot.slane %v310, %v1018
        %v1020 = vmul.f32 %v944, %v1019
        %v1021 = vmul.f32 %v945, %v1019
        %v1022 = vmul.f32 %v946, %v1019
        %v1023 = vmul.f32 %v947, %v1019
        %v1024 = vmul.f32 %v948, %v1019
        %v1025 = vmul.f32 %v949, %v1019
        %v1026 = vmul.f32 %v950, %v1019
        %v1027 = vmul.f32 %v951, %v1019
        %v1036 = vrot.slane %v1020, 1
        %v1037 = vrot.slane %v1021, 1
        %v1038 = vsel %vm420, %v1036, %v1037
        %v1039 = vrot.slane %v1022, 1
        %v1040 = vrot.slane %v1023, 1
        %v1041 = vsel %vm420, %v1039, %v1040
        %v1042 = vrot.slane %v1024, 1
        %v1043 = vrot.slane %v1025, 1
        %v1044 = vsel %vm420, %v1042, %v1043
        %v1045 = vrot.slane %v1026, 1
        %v1046 = vrot.slane %v1027, 1
        %v1047 = vsel %vm420, %v1045, %v1046
        %v1052 = vadd.f32 %v1012, %v1038
        %v1053 = vadd.f32 %v1013, %v1041
        %v1054 = vadd.f32 %v1014, %v1044
        %v1055 = vadd.f32 %v1015, %v1047
        %v1056 = vlaneseq
        %v1057 = vshrl.u32 %v1056, 7
        %v1058 = vsub.s32 0, %v1057
        %v1059 = vrot.slane %v311, %v1058
        %v1060 = vmul.f32 %v942, %v1059
        %v1061 = vmul.f32 %v944, %v1059
        %v1062 = vmul.f32 %v946, %v1059
        %v1063 = vmul.f32 %v948, %v1059
        %v1068 = vrot.slane %v1060, 7
        %v1069 = vrot.slane %v1061, 7
        %v1070 = vrot.slane %v1062, 7
        %v1071 = vrot.slane %v1063, 7
        %v1076 = vadd.f32 %v883, %v1068
        %v1077 = vadd.f32 %v884, %v1068
        %v1078 = vadd.f32 %v885, %v1069
        %v1079 = vadd.f32 %v886, %v1069
        %v1080 = vadd.f32 %v887, %v1070
        %v1081 = vadd.f32 %v888, %v1070
        %v1082 = vadd.f32 %v889, %v1071
        %v1083 = vadd.f32 %v890, %v1071
        %v1092 = vrot.slane %v1076, 1
        %v1093 = vrot.slane %v1077, 1
        %v1094 = vsel %vm420, %v1092, %v1093
        %v1095 = vrot.slane %v1078, 1
        %v1096 = vrot.slane %v1079, 1
        %v1097 = vsel %vm420, %v1095, %v1096
        %v1098 = vrot.slane %v1080, 1
        %v1099 = vrot.slane %v1081, 1
        %v1100 = vsel %vm420, %v1098, %v1099
        %v1101 = vrot.slane %v1082, 1
        %v1102 = vrot.slane %v1083, 1
        %v1103 = vsel %vm420, %v1101, %v1102
        %1104 = vrot.lane.b32.xlu0 %v1094, 8
        %v1105 = vpop.permute.xlu0 %1104
        %1106 = vrot.lane.b32.xlu0 %v1097, 8
        %v1107 = vpop.permute.xlu0 %1106
        %1108 = vrot.lane.b32.xlu0 %v1100, 8
        %v1109 = vpop.permute.xlu0 %1108
        %1110 = vrot.lane.b32.xlu0 %v1103, 8
        %v1111 = vpop.permute.xlu0 %1110
        %vm1116 = vcmask 64512
        %v1117 = vsel %vm1116, %v1052, %v1105
        %v1118 = vsel %vm1116, %v1053, %v1107
        %v1119 = vsel %vm1116, %v1054, %v1109
        %v1120 = vsel %vm1116, %v1055, %v1111
        %v1121 = vpack.c.bf16 %v1118, %v1117
        %v1122 = vpack.c.bf16 %v1120, %v1119
        %v1123 = vld [vmem:[%s5] sm:$0xf]
        %v1124 = vld [vmem:[%s5 + $0x4] sm:$0xf]
        %v1125 = vld [vmem:[%s6] sm:$0x1]
        %v1127 = vlaneseq
        %v1128 = vshrl.u32 %v1127, 7
        %v1129 = vsub.s32 0, %v1128
        %v1130 = vrot.slane %v1125, %v1129
        %v1134 = vunpack.c.l.b16 %v1123
        %v1135 = vunpack.c.l.b16 %v1124
        %v1136 = vpack.c.b16 %v1135, %v1134
        %vm1138 = vcmask 130048
        %v1140 = vsel %vm1138, %v1121, 0
        %v1143 = vsel %vm1138, %v1122, 0
        %1145 = vmatprep.subr.bf16.mxu0 0
        %1146 = vmatpush1.bf16.msra.mxu0 %v1136
        %1147 = vmatprep.subr.bf16.mxu0 0
        %1148 = vmatpush1.bf16.msra.mxu0 0
        %1149 = vmatprep.subr.bf16.mxu0 0
        %1150 = vmatpush1.bf16.msra.mxu0 0
        %1151 = vmatprep.subr.bf16.mxu0 0
        %1152 = vmatpush1.bf16.msra.mxu0 0
        %1153 = vmatprep.subr.bf16.mxu0 0
        %1154 = vmatpush1.bf16.msra.mxu0 0
        %1155 = vmatprep.subr.bf16.mxu0 0
        %1156 = vmatpush1.bf16.msra.mxu0 0
        %1157 = vmatprep.subr.bf16.mxu0 0
        %1158 = vmatpush1.bf16.msra.mxu0 0
        %1159 = vmatprep.subr.bf16.mxu0 0
        %1160 = vmatpush1.bf16.msra.mxu0 0
        %1161 = vmatprep.subr.bf16.mxu0 0
        %1162 = vmatpush1.bf16.msra.mxu0 0
        %1163 = vmatprep.subr.bf16.mxu0 0
        %1164 = vmatpush1.bf16.msra.mxu0 0
        %1165 = vmatprep.subr.bf16.mxu0 0
        %1166 = vmatpush1.bf16.msra.mxu0 0
        %1167 = vmatprep.subr.bf16.mxu0 0
        %1168 = vmatpush1.bf16.msra.mxu0 0
        %1169 = vmatprep.subr.bf16.mxu0 0
        %1170 = vmatpush1.bf16.msra.mxu0 0
        %1171 = vmatprep.subr.bf16.mxu0 0
        %1172 = vmatpush1.bf16.msra.mxu0 0
        %1173 = vmatprep.subr.bf16.mxu0 0
        %1174 = vmatpush1.bf16.msra.mxu0 0
        %1175 = vmatprep.subr.bf16.mxu0 0
        %1176 = vmatpush1.bf16.msra.mxu0 0
        %1177 = vmatprep.mubr.bf16.mxu0 0
        %1178 = vmatmul.mubr.bf16.gmra.mrb[0].mxu0 %v1140
        %v1179 = vpop.f32.mrb[0].mxu0
        %v1180 = vadd.f32 %v1130, %v1179
        %v1181 = vpop.f32.mrb[0].mxu0
        %v1182 = vpop.f32.mrb[0].mxu0
        %v1183 = vadd.f32 %v1130, %v1182
        %v1184 = vpop.f32.mrb[0].mxu0
        %1185 = vmatprep.mubr.bf16.mxu0 0
        %1186 = vmatmul.mubr.bf16.gmra.mrb[0].mxu0 %v1143
        %v1187 = vpop.f32.mrb[0].mxu0
        %v1188 = vadd.f32 %v1130, %v1187
        %v1189 = vpop.f32.mrb[0].mxu0
        %v1190 = vpop.f32.mrb[0].mxu0
        %v1191 = vadd.f32 %v1130, %v1190
        %v1192 = vpop.f32.mrb[0].mxu0
        %1193 = vdwg.mxu0
        %vm1194 = vcmp.gt.f32.partialorder %v1180, 0.0
        %vm1195 = vcmp.gt.f32.partialorder %v1183, 0.0
        %vm1196 = vcmp.gt.f32.partialorder %v1188, 0.0
        %vm1197 = vcmp.gt.f32.partialorder %v1191, 0.0
        %v1198 = vmin.f32 %v1180, 0.0
        %v1199 = vmin.f32 %v1183, 0.0
        %v1200 = vmin.f32 %v1188, 0.0
        %v1201 = vmin.f32 %v1191, 0.0
        %v1202 = vmul.f32 %v1198, 1.442695
        %v1203 = vpow.pop %v1202
        %v1204 = vmul.f32 %v1199, 1.442695
        %v1205 = vpow.pop %v1204
        %v1206 = vmul.f32 %v1200, 1.442695
        %v1207 = vpow.pop %v1206
        %v1208 = vmul.f32 %v1201, 1.442695
        %v1209 = vpow.pop %v1208
        %v1210 = vsub.f32 %v1203, 1.0
        %v1211 = vsub.f32 %v1205, 1.0
        %v1212 = vsub.f32 %v1207, 1.0
        %v1213 = vsub.f32 %v1209, 1.0
        %v1214 = vsel %vm1194, %v1180, %v1210
        %v1215 = vsel %vm1195, %v1183, %v1211
        %v1216 = vsel %vm1196, %v1188, %v1212
        %v1217 = vsel %vm1197, %v1191, %v1213
        %1218 = vst.msk [vmem:[%s295] sm:$0xff] %vm1116, %v1214
        %1219 = vst.msk [vmem:[%s295 + $0x8] sm:$0xff] %vm1116, %v1215
        %1220 = vst.msk [vmem:[%s295 + $0x10] sm:$0xff] %vm1116, %v1216
        %1221 = vst.msk [vmem:[%s295 + $0x18] sm:$0xff] %vm1116, %v1217
        %s1222 = sand.u32 %s197, 1
        %s1223 = scalar_lea.sflag [#allocation3], %s1222
        %s1224 = sand.u32 %s197, 1
        %s1225 = smul.addr %s1224, 32
        %s1226 = scalar_lea.vmem [#allocation2], %s1225
        // Predicated region
        $region49: #{tpu_custom_call.1} parent=47 // pred_check
          %p1227 = pneg %p207
        $region50: #{tpu_custom_call.1} parent=47 // pred_check_branch
          %1229 = sbr.rel (%p1227) target = $region52
        $region51: #{tpu_custom_call.1} parent=47 // pred_region
          %s1230 = smul.u32 4, %s26
          %s1232 = ssub.s32 512, 512
          %1233 = vsyncadd %s1223, %s1232
          %s1234 = smul.addr %s25, 8
          %s1235 = sadd.s32 %s1230, %s1234
          %s1236 = smul.addr %s1235, 128
          %s1237 = scalar_lea.hbm %s7, %s1236
          %s1238 = sshll.u32 %s1226, 4
          %s1239 = int_to_ptr.vmem [resolvable:$true] %s1238
          %1244 = dma.vmem_to_hbm [thread:$0]  %s1239, 512, %s1237, %s1223, 128, 128, 8
        $region52: #{tpu_custom_call.1} parent=47 // pred_fallthru
          _
      $region48: #{tpu_custom_call.1} parent=5 // pred_fallthru
        _
      %p1245 = scmp.le.s32.totalorder 2, %s16
      // Predicated region
      $region53: #{tpu_custom_call.1} parent=5 // pred_check
        %p1246 = pneg %p1245
      $region54: #{tpu_custom_call.1} parent=5 // pred_check_branch
        %1248 = sbr.rel (%p1246) target = $region56
      $region55: #{tpu_custom_call.1} parent=5 // pred_region
        %s1249 = ssub.s32 %s16, 2
        // Predicated region
        $region57: #{tpu_custom_call.1} parent=55 // pred_check
          %p1250 = pneg %p213
        $region58: #{tpu_custom_call.1} parent=55 // pred_check_branch
          %1252 = sbr.rel (%p1250) target = $region60
        $region59: #{tpu_custom_call.1} parent=55 // pred_region
          %s1253 = sand.u32 %s198, 1
          %s1254 = scalar_lea.sflag [#allocation3], %s1253
          %s1255 = sand.u32 %s198, 1
          %s1256 = smul.addr %s1255, 32
          %s1257 = scalar_lea.vmem [#allocation2], %s1256
          %1258 = dma.done %s1254, 512
        $region60: #{tpu_custom_call.1} parent=55 // pred_fallthru
          _
      $region56: #{tpu_custom_call.1} parent=5 // pred_fallthru
        _
    $region6: #{tpu_custom_call.1} parent=1 // loop_footer
      %s20 = sadd.s32 1, %s16
    $region7: #{tpu_custom_call.1} parent=1 // loop_footer_branch
      %15 = sbr.rel target = $region3
    $region8: #{tpu_custom_call.1} parent=1 // loop_exit
      _
    %1259 = vsyncpa [#allocation3], 1
    %s1260 = scalar_lea.sflag [#allocation3], 1
    %1261 = vsyncpa %s1260, 1

</llo_original>
